<compile_context>
chip_gen: v5e
topology: v5e:2x2
jax: 0.10.0
libtpu: 0.0.40
codegen_flags: <defaults>
</compile_context>

<pallas_src>
import functools

import jax
import jax.numpy as jnp
from jax.experimental import pallas as pl
from jax.experimental.pallas import tpu as pltpu

EPSILON = 1e-9


def _round_up(x, m):
    return ((x + m - 1) // m) * m


def _cdiv(a, b):
    return (a + b - 1) // b


def _event_bce_kernel(pred_ref, tgt_ref, out_ref, acc_ref, *,
                      rows_blk, n_valid, n_tiles, tiles_per_chunk, hard_labels):
    c = pl.program_id(0)           # parallel chunk axis (v7x: one per TensorCore)
    t = pl.program_id(1)           # sequential reduction axis within a chunk
    n_t = pl.num_programs(1)

    @pl.when(t == 0)
    def _():
        acc_ref[...] = jnp.zeros_like(acc_ref)

    # Global tile index BEFORE the index_map clamp: decides whether this step is
    # a real tile (last chunk may have a few duplicate steps) and whether it
    # touches the ragged tail that needs masking.
    gt = c * tiles_per_chunk + t
    is_real = gt < n_tiles
    flat_start = gt * (rows_blk * 128)
    needs_mask = flat_start + rows_blk * 128 > n_valid

    p = pred_ref[...].astype(jnp.float32)      # (rows_blk, 128), lane-dense
    tg = tgt_ref[...].astype(jnp.float32)      # (rows_blk, 128)

    if hard_labels:
        # Valid only for exact 0/1 targets: one EUP log per element.
        term = jnp.log(jnp.where(tg > 0.5, p, 1.0 - p) + EPSILON)
    else:
        # General soft-label form — matches the PyTorch module semantics.
        term = tg * jnp.log(p + EPSILON) + (1.0 - tg) * jnp.log(1.0 - p + EPSILON)

    # Interior tiles: plain per-lane accumulation, no masking work at all.
    @pl.when(jnp.logical_and(is_real, jnp.logical_not(needs_mask)))
    def _():
        acc_ref[...] += jnp.sum(term.reshape(rows_blk // 8, 8, 128), axis=0)

    # Boundary tile(s): mask out padded lanes / uninitialised rows past n_valid.
    @pl.when(jnp.logical_and(is_real, needs_mask))
    def _():
        flat = (flat_start
                + jax.lax.broadcasted_iota(jnp.int32, (rows_blk, 128), 0) * 128
                + jax.lax.broadcasted_iota(jnp.int32, (rows_blk, 128), 1))
        masked = jnp.where(flat < n_valid, term, 0.0)
        acc_ref[...] += jnp.sum(masked.reshape(rows_blk // 8, 8, 128), axis=0)

    @pl.when(t == n_t - 1)
    def _():
        out_ref[0] = acc_ref[...]          # (8,128) per-lane partial sums


def event_detection_loss(pred_events, target_events, weights, *,
                         rows_per_block=4096, num_chunks=2, hard_labels=False):
    """Scalar float32 loss matching the torch Event_Detection_Loss forward."""
    B, E = pred_events.shape
    n = B * E
    assert 128 % E == 0, "lane-periodic weight hoist needs num_events | 128"
    # TODO(synk): general num_events (not dividing 128) would need per-element
    # weights inside the kernel instead of the per-lane finalize.

    w_flat = jnp.reshape(weights, (-1,)).astype(jnp.float32)      # (E,)

    # Row-major flatten (free) to lane-dense (R, 128); pad only when B*E is not
    # a multiple of 128 (padding materialises a copy, avoided in the hot path).
    rem = n % 128
    if rem:
        pad = 128 - rem
        pred2 = jnp.pad(pred_events.reshape(-1), (0, pad)).reshape(-1, 128)
        tgt2 = jnp.pad(target_events.reshape(-1), (0, pad)).reshape(-1, 128)
    else:
        pred2 = pred_events.reshape(-1, 128)
        tgt2 = target_events.reshape(-1, 128)
    R = pred2.shape[0]

    rows_per_block = max(8, _round_up(rows_per_block, 8))
    if R > rows_per_block:
        rows_blk = rows_per_block          # multiple of 8; ragged last tile OK
    else:
        # Tiny problem: single tile; pad rows (cheap, <= ~2 MiB) so the block
        # row count is a multiple of 8 and exactly covers the array.
        r_pad = _round_up(R, 8)
        if r_pad != R:
            pred2 = jnp.pad(pred2, ((0, r_pad - R), (0, 0)))
            tgt2 = jnp.pad(tgt2, ((0, r_pad - R), (0, 0)))
            R = r_pad
        rows_blk = R

    n_tiles = _cdiv(R, rows_blk)
    nchunks = num_chunks if (num_chunks > 1 and n_tiles >= num_chunks) else 1
    tpc = _cdiv(n_tiles, nchunks)          # tiles per chunk

    def in_map(c, t):
        # Clamp so the (few) duplicate steps of the last chunk stay in bounds;
        # the kernel's is_real guard skips their accumulation.
        return (jnp.minimum(c * tpc + t, n_tiles - 1), 0)

    kernel = functools.partial(
        _event_bce_kernel, rows_blk=rows_blk, n_valid=n, n_tiles=n_tiles,
        tiles_per_chunk=tpc, hard_labels=hard_labels)

    partials = pl.pallas_call(
        kernel,
        out_shape=jax.ShapeDtypeStruct((nchunks, 8, 128), jnp.float32),
        grid_spec=pltpu.PrefetchScalarGridSpec(
            num_scalar_prefetch=0,
            grid=(nchunks, tpc),
            in_specs=[
                pl.BlockSpec((rows_blk, 128), in_map),
                pl.BlockSpec((rows_blk, 128), in_map),
            ],
            out_specs=pl.BlockSpec((1, 8, 128), lambda c, t: (c, 0, 0)),
            scratch_shapes=[pltpu.VMEM((8, 128), jnp.float32)],
        ),
        compiler_params=pltpu.CompilerParams(
            dimension_semantics=("parallel", "arbitrary"),
            vmem_limit_bytes=32 * 1024 * 1024,
        ),
    )(pred2, tgt2)

    # Finalize outside the kernel: per-lane sums, lane-periodic weights
    # (lane l holds event l % E), constant scale -1/(B*E).
    per_lane = jnp.sum(partials, axis=(0, 1))                    # (128,)
    w_lane = jnp.tile(w_flat, 128 // E)                          # (128,)
    return jnp.sum(per_lane * w_lane) * (-1.0 / float(n))


def make_weights(raw=(1.0, 3.0)):
    w = jnp.asarray(raw, dtype=jnp.float32).reshape(1, -1)
    return w / jnp.sum(w)


def _reference_loss(pred, tgt, w):
    term = tgt * jnp.log(pred + EPSILON) + (1.0 - tgt) * jnp.log(1.0 - pred + EPSILON)
    return -jnp.mean(w * term)


if __name__ == "__main__":
    key = jax.random.PRNGKey(0)
    k1, k2, k3, k4 = jax.random.split(key, 4)
    weights = make_weights((1.0, 3.0))

    # 1) Small shape matching the module (batch=8, num_events=2).
    B, E = 8, 2
    pred_small = jax.random.uniform(k1, (B, E), jnp.float32, minval=0.05, maxval=0.95)
    tgt_small = (jax.random.uniform(k2, (B, E)) > 0.5).astype(jnp.float32)

    loss_small = event_detection_loss(pred_small, tgt_small, weights)
    jax.block_until_ready(loss_small)
    ref_small = _reference_loss(pred_small, tgt_small, weights)
    assert jnp.allclose(loss_small, ref_small, rtol=1e-5, atol=1e-6), (loss_small, ref_small)

    # 2) Larger ragged batch exercising the multi-tile grid, the parallel chunk
    #    axis, the clamped-index duplicate-step guard, and boundary masking.
    Bl = 70000
    pred_big = jax.random.uniform(k3, (Bl, E), jnp.float32, minval=0.05, maxval=0.95)
    tgt_big = (jax.random.uniform(k4, (Bl, E)) > 0.5).astype(jnp.float32)

    loss_big = event_detection_loss(pred_big, tgt_big, weights,
                                    rows_per_block=256, num_chunks=2)
    jax.block_until_ready(loss_big)
    ref_big = _reference_loss(pred_big, tgt_big, weights)
    assert jnp.allclose(loss_big, ref_big, rtol=5e-5, atol=1e-6), (loss_big, ref_big)

    # 3) Hard-label fast path (single log) — valid because these targets are 0/1.
    loss_hard = event_detection_loss(pred_big, tgt_big, weights,
                                     rows_per_block=256, num_chunks=2,
                                     hard_labels=True)
    jax.block_until_ready(loss_hard)
    assert jnp.allclose(loss_hard, ref_big, rtol=5e-5, atol=1e-6), (loss_hard, ref_big)

    print("KERNEL_OK")
</pallas_src>

<mosaic_0001>
module attributes {stable_mosaic.version = 11 : i64} {
  func.func @_event_bce_kernel(%arg0: i32, %arg1: i32, %arg2: memref<8x128xf32, #tpu.memory_space<vmem>>, %arg3: memref<8x128xf32, #tpu.memory_space<vmem>>, %arg4: memref<1x8x128xf32, #tpu.memory_space<vmem>>, %arg5: memref<8x128xf32, #tpu.memory_space<vmem>>) attributes {dimension_semantics = [#tpu.dimension_semantics<parallel>, #tpu.dimension_semantics<arbitrary>], iteration_bounds = array<i64: 1, 1>, scalar_prefetch = 0 : i64, scratch_operands = 1 : i64, tpu.core_type = #tpu.core_type<tc>, window_params = [{transform_indices = @transform_0, window_bounds = array<i64: 8, 128>}, {transform_indices = @transform_1, window_bounds = array<i64: 8, 128>}, {transform_indices = @transform_2, window_bounds = array<i64: 1, 8, 128>}]} {
    %c0_i32 = arith.constant 0 : i32
    %0 = arith.cmpi eq, %arg1, %c0_i32 : i32
    %1 = arith.extui %0 : i1 to i32
    %c0_i32_0 = arith.constant 0 : i32
    %2 = arith.cmpi ne, %1, %c0_i32_0 : i32
    scf.if %2 {
      %cst_13 = arith.constant 0.000000e+00 : f32
      %34 = vector.broadcast %cst_13 : f32 to vector<8x128xf32>
      %c0_14 = arith.constant 0 : index
      %c0_15 = arith.constant 0 : index
      %35 = vector.load %arg5[%c0_14, %c0_15] : memref<8x128xf32, #tpu.memory_space<vmem>>, vector<8x128xf32>
      tpu.vector_store %arg5[%c0_14, %c0_15], %34 {strides = array<i32>} : memref<8x128xf32, #tpu.memory_space<vmem>>, vector<8x128xf32>,
    } else {
    }
    %c1_i32 = arith.constant 1 : i32
    %3 = arith.muli %arg0, %c1_i32 : i32
    %4 = arith.addi %3, %arg1 : i32
    %c1_i32_1 = arith.constant 1 : i32
    %5 = arith.cmpi slt, %4, %c1_i32_1 : i32
    %c1024_i32 = arith.constant 1024 : i32
    %6 = arith.muli %4, %c1024_i32 : i32
    %c1024_i32_2 = arith.constant 1024 : i32
    %7 = arith.addi %6, %c1024_i32_2 : i32
    %c16_i32 = arith.constant 16 : i32
    %8 = arith.cmpi sgt, %7, %c16_i32 : i32
    %c0 = arith.constant 0 : index
    %c0_3 = arith.constant 0 : index
    %9 = vector.load %arg2[%c0, %c0_3] : memref<8x128xf32, #tpu.memory_space<vmem>>, vector<8x128xf32>
    %c0_4 = arith.constant 0 : index
    %c0_5 = arith.constant 0 : index
    %10 = vector.load %arg3[%c0_4, %c0_5] : memref<8x128xf32, #tpu.memory_space<vmem>>, vector<8x128xf32>
    %cst = arith.constant 9.99999971E-10 : f32
    %11 = vector.broadcast %cst : f32 to vector<8x128xf32>
    %12 = arith.addf %9, %11 : vector<8x128xf32>
    %13 = math.log %12 : vector<8x128xf32>
    %14 = arith.mulf %10, %13 : vector<8x128xf32>
    %cst_6 = arith.constant 1.000000e+00 : f32
    %15 = vector.broadcast %cst_6 : f32 to vector<8x128xf32>
    %16 = arith.subf %15, %10 : vector<8x128xf32>
    %cst_7 = arith.constant 1.000000e+00 : f32
    %17 = vector.broadcast %cst_7 : f32 to vector<8x128xf32>
    %18 = arith.subf %17, %9 : vector<8x128xf32>
    %cst_8 = arith.constant 9.99999971E-10 : f32
    %19 = vector.broadcast %cst_8 : f32 to vector<8x128xf32>
    %20 = arith.addf %18, %19 : vector<8x128xf32>
    %21 = math.log %20 : vector<8x128xf32>
    %22 = arith.mulf %16, %21 : vector<8x128xf32>
    %23 = arith.addf %14, %22 : vector<8x128xf32>
    %true = arith.constant true
    %24 = arith.xori %8, %true : i1
    %25 = arith.andi %5, %24 : i1
    %26 = arith.extui %25 : i1 to i32
    %c0_i32_9 = arith.constant 0 : i32
    %27 = arith.cmpi ne, %26, %c0_i32_9 : i32
    scf.if %27 {
      %c0_13 = arith.constant 0 : index
      %c0_14 = arith.constant 0 : index
      %34 = vector.load %arg5[%c0_13, %c0_14] : memref<8x128xf32, #tpu.memory_space<vmem>>, vector<8x128xf32>
      %35 = vector.shape_cast %23 : vector<8x128xf32> to vector<1x8x128xf32>
      %cst_15 = arith.constant dense<0.000000e+00> : vector<8x128xf32>
      %36 = vector.multi_reduction <add>, %35, %cst_15 [0] : vector<1x8x128xf32> to vector<8x128xf32>
      %37 = arith.addf %34, %36 : vector<8x128xf32>
      %c0_16 = arith.constant 0 : index
      %c0_17 = arith.constant 0 : index
      %38 = vector.load %arg5[%c0_16, %c0_17] : memref<8x128xf32, #tpu.memory_space<vmem>>, vector<8x128xf32>
      tpu.vector_store %arg5[%c0_16, %c0_17], %37 {strides = array<i32>} : memref<8x128xf32, #tpu.memory_space<vmem>>, vector<8x128xf32>,
    } else {
    }
    %28 = arith.andi %5, %8 : i1
    %29 = arith.extui %28 : i1 to i32
    %c0_i32_10 = arith.constant 0 : i32
    %30 = arith.cmpi ne, %29, %c0_i32_10 : i32
    scf.if %30 {
      %34 = tpu.iota {dimensions = array<i32: 0>} : vector<8x128xi32>
      %c128_i32 = arith.constant 128 : i32
      %35 = vector.broadcast %c128_i32 : i32 to vector<8x128xi32>
      %36 = arith.muli %34, %35 : vector<8x128xi32>
      %37 = vector.broadcast %6 : i32 to vector<8x128xi32>
      %38 = arith.addi %37, %36 : vector<8x128xi32>
      %39 = tpu.iota {dimensions = array<i32: 1>} : vector<8x128xi32>
      %40 = arith.addi %38, %39 : vector<8x128xi32>
      %c16_i32_13 = arith.constant 16 : i32
      %41 = vector.broadcast %c16_i32_13 : i32 to vector<8x128xi32>
      %42 = arith.cmpi slt, %40, %41 : vector<8x128xi32>
      %cst_14 = arith.constant 0.000000e+00 : f32
      %43 = vector.broadcast %cst_14 : f32 to vector<8x128xf32>
      %44 = arith.select %42, %23, %43 : vector<8x128xi1>, vector<8x128xf32>
      %c0_15 = arith.constant 0 : index
      %c0_16 = arith.constant 0 : index
      %45 = vector.load %arg5[%c0_15, %c0_16] : memref<8x128xf32, #tpu.memory_space<vmem>>, vector<8x128xf32>
      %46 = vector.shape_cast %44 : vector<8x128xf32> to vector<1x8x128xf32>
      %cst_17 = arith.constant dense<0.000000e+00> : vector<8x128xf32>
      %47 = vector.multi_reduction <add>, %46, %cst_17 [0] : vector<1x8x128xf32> to vector<8x128xf32>
      %48 = arith.addf %45, %47 : vector<8x128xf32>
      %c0_18 = arith.constant 0 : index
      %c0_19 = arith.constant 0 : index
      %49 = vector.load %arg5[%c0_18, %c0_19] : memref<8x128xf32, #tpu.memory_space<vmem>>, vector<8x128xf32>
      tpu.vector_store %arg5[%c0_18, %c0_19], %48 {strides = array<i32>} : memref<8x128xf32, #tpu.memory_space<vmem>>, vector<8x128xf32>,
    } else {
    }
    %c0_i32_11 = arith.constant 0 : i32
    %31 = arith.cmpi eq, %arg1, %c0_i32_11 : i32
    %32 = arith.extui %31 : i1 to i32
    %c0_i32_12 = arith.constant 0 : i32
    %33 = arith.cmpi ne, %32, %c0_i32_12 : i32
    scf.if %33 {
      %c0_13 = arith.constant 0 : index
      %c0_14 = arith.constant 0 : index
      %34 = vector.load %arg5[%c0_13, %c0_14] : memref<8x128xf32, #tpu.memory_space<vmem>>, vector<8x128xf32>
      %c0_15 = arith.constant 0 : index
      %c0_16 = arith.constant 0 : index
      %c0_17 = arith.constant 0 : index
      %35 = vector.load %arg4[%c0_15, %c0_16, %c0_17] : memref<1x8x128xf32, #tpu.memory_space<vmem>>, vector<1x8x128xf32>
      %36 = vector.shape_cast %35 : vector<1x8x128xf32> to vector<8x128xf32>
      %37 = vector.shape_cast %34 : vector<8x128xf32> to vector<1x8x128xf32>
      tpu.vector_store %arg4[%c0_15, %c0_16, %c0_17], %37 {strides = array<i32>} : memref<1x8x128xf32, #tpu.memory_space<vmem>>, vector<1x8x128xf32>,
    } else {
    }
    return
  }
  func.func @transform_0(%arg0: i32, %arg1: i32) -> (i32, i32) {
    %c1_i32 = arith.constant 1 : i32
    %0 = arith.muli %arg0, %c1_i32 : i32
    %1 = arith.addi %0, %arg1 : i32
    %c0_i32 = arith.constant 0 : i32
    %2 = arith.minsi %1, %c0_i32 : i32
    %c0_i32_0 = arith.constant 0 : i32
    %c0_i32_1 = arith.constant 0 : i32
    return %2, %c0_i32_0 : i32, i32
  }
  func.func @transform_1(%arg0: i32, %arg1: i32) -> (i32, i32) {
    %c1_i32 = arith.constant 1 : i32
    %0 = arith.muli %arg0, %c1_i32 : i32
    %1 = arith.addi %0, %arg1 : i32
    %c0_i32 = arith.constant 0 : i32
    %2 = arith.minsi %1, %c0_i32 : i32
    %c0_i32_0 = arith.constant 0 : i32
    %c0_i32_1 = arith.constant 0 : i32
    return %2, %c0_i32_0 : i32, i32
  }
  func.func @transform_2(%arg0: i32, %arg1: i32) -> (i32, i32, i32) {
    %c0_i32 = arith.constant 0 : i32
    %c0_i32_0 = arith.constant 0 : i32
    %c0_i32_1 = arith.constant 0 : i32
    return %arg0, %c0_i32, %c0_i32_0 : i32, i32, i32
  }
}

</mosaic_0001>

<llo_original>
// kernel: tpu_custom_call.1
$region0: #{tpu_custom_call.1}
  #allocation0 [shape = 'u32[]', space=smem, size = 0x4, offset = 0x4, fixed_abs, tag = 'smem constant byte address 0x4 - core index']
  #allocation1 [shape = 'u32[72,128]{1,0:T(1,128)}', space=vmem, size = 0x9000, scoped, tag = 'internal scratch']
  #allocation2 [shape = 'f32[8,128]{1,0:T(8,128)}', space=vmem, size = 0x1000, scoped, tag = 'scratch operand']
  %s0 = inlined_call_operand.hbm [shape: f32[8,128], index: 0, kind: input, shape index: {}]
  %s1 = inlined_call_operand.hbm [shape: f32[8,128], index: 1, kind: input, shape index: {}]
  %s2 = inlined_call_operand.hbm [shape: f32[1,8,128], index: 2, kind: output, shape index: {}]
  %s3 = sld [smem:[#allocation0]]
  $region42: #{tpu_custom_call.1} parent=0
    _
  %s5 = ssub.s32 1, %s3
  %s6 = scalar_select 0, %s5, %s3
  $region1: #{tpu_custom_call.1} parent=0
    #allocation3 [shape = 'u8[4096]{0}', space=vmem, size = 0x1000, scoped, tag = 'input window, operand 0, single buffered']
    #allocation4 [shape = 's32[1]{0}', space=sflag, size = 0x4, scoped, tag = 'scoped memory for tpu_custom_call.1']
    #allocation5 [shape = 's32[1]{0}', space=sflag, size = 0x4, scoped, tag = 'scoped memory for tpu_custom_call.1']
    #allocation6 [shape = 'u8[4096]{0}', space=vmem, size = 0x1000, scoped, tag = 'input window, operand 1, single buffered']
    #allocation7 [shape = 's32[1]{0}', space=sflag, size = 0x4, scoped, tag = 'scoped memory for tpu_custom_call.1']
    #allocation8 [shape = 'u8[4096]{0}', space=vmem, size = 0x1000, scoped, tag = 'output window, operand 0, single buffered']
    %7 = vsyncpa [#allocation4], 0
    %8 = vsyncpa [#allocation7], 0
    %9 = vsyncpa [#allocation5], 0
    // Predicated region
    $region2: #{tpu_custom_call.1} parent=1 // pred_check
      _
    $region3: #{tpu_custom_call.1} parent=1 // pred_check_branch
      %11 = sbr.rel (0) target = $region5
    $region4: #{tpu_custom_call.1} parent=1 // pred_region
      %s12 = sadd.s32 0, 0
      %p13 = scmp.lt.s32.totalorder %s12, 0
      %s14 = scalar_select %p13, %s12, 0
      %16 = vsyncadd [#allocation4], 0
      %s17 = smul.addr %s14, 8
      %s18 = scalar_lea.hbm %s0, %s17
      %s20 = sshll.u32 %s18, 4
      %s21 = int_to_ptr.hbm [resolvable:$true] %s20
      %s22 = sshll.u32 [#allocation3], 4
      %s23 = int_to_ptr.vmem [resolvable:$true] %s22
      %25 = dma.hbm_to_vmem [thread:$0]  %s21, 128, %s23, [#allocation4]
    $region5: #{tpu_custom_call.1} parent=1 // pred_fallthru
      _
    // Predicated region
    $region6: #{tpu_custom_call.1} parent=1 // pred_check
      _
    $region7: #{tpu_custom_call.1} parent=1 // pred_check_branch
      %27 = sbr.rel (0) target = $region9
    $region8: #{tpu_custom_call.1} parent=1 // pred_region
      %s28 = sadd.s32 0, 0
      %p29 = scmp.lt.s32.totalorder %s28, 0
      %s30 = scalar_select %p29, %s28, 0
      %32 = vsyncadd [#allocation7], 0
      %s33 = smul.addr %s30, 8
      %s34 = scalar_lea.hbm %s1, %s33
      %s36 = sshll.u32 %s34, 4
      %s37 = int_to_ptr.hbm [resolvable:$true] %s36
      %s38 = sshll.u32 [#allocation6], 4
      %s39 = int_to_ptr.vmem [resolvable:$true] %s38
      %41 = dma.hbm_to_vmem [thread:$0]  %s37, 128, %s39, [#allocation7]
    $region9: #{tpu_custom_call.1} parent=1 // pred_fallthru
      _
    // Predicated region
    $region10: #{tpu_custom_call.1} parent=1 // pred_check
      _
    $region11: #{tpu_custom_call.1} parent=1 // pred_check_branch
      %43 = sbr.rel (0) target = $region13
    $region12: #{tpu_custom_call.1} parent=1 // pred_region
      %45 = dma.done [#allocation4], 128
    $region13: #{tpu_custom_call.1} parent=1 // pred_fallthru
      _
    // Predicated region
    $region14: #{tpu_custom_call.1} parent=1 // pred_check
      _
    $region15: #{tpu_custom_call.1} parent=1 // pred_check_branch
      %47 = sbr.rel (0) target = $region17
    $region16: #{tpu_custom_call.1} parent=1 // pred_region
      %49 = dma.done [#allocation7], 128
    $region17: #{tpu_custom_call.1} parent=1 // pred_fallthru
      _
    %s50 = sadd.s32 0, 0
    %p51 = scmp.lt.s32.totalorder %s50, 0
    %s52 = scalar_select %p51, %s50, 0
    %s53 = sadd.s32 0, 0
    %p54 = scmp.lt.s32.totalorder %s53, 0
    %s55 = scalar_select %p54, %s53, 0
    %p56 = scmp.eq.s32.totalorder 0, 0
    // Predicated region
    $region18: #{tpu_custom_call.1} parent=1 // pred_check
      %p57 = pneg %p56
    $region19: #{tpu_custom_call.1} parent=1 // pred_check_branch
      %59 = sbr.rel (%p57) target = $region21
    $region20: #{tpu_custom_call.1} parent=1 // pred_region
      %60 = vst [vmem:[#allocation2] sm:$0xff] 0.0
    $region21: #{tpu_custom_call.1} parent=1 // pred_fallthru
      _
    %s61 = sadd.s32 0, 0
    %p62 = scmp.lt.s32.totalorder %s61, 1
    %s63 = smul.u32 %s61, 1024
    %s64 = sadd.s32 %s63, 1024
    %p65 = scmp.gt.s32.totalorder %s64, 16
    %v66 = vld [vmem:[#allocation3] sm:$0xff]
    %v67 = vld [vmem:[#allocation6] sm:$0xff]
    %v68 = vadd.f32 %v66, 1e-09
    %v69 = vlog2.pop %v68
    %v70 = vmul.f32 %v69, 0.6931472
    %v71 = vmul.f32 %v67, %v70
    %v72 = vsub.f32 1.0, %v67
    %v73 = vsub.f32 1.0, %v66
    %v74 = vadd.f32 %v73, 1e-09
    %v75 = vlog2.pop %v74
    %v76 = vmul.f32 %v75, 0.6931472
    %v77 = vmul.f32 %v72, %v76
    %v78 = vadd.f32 %v71, %v77
    %p79 = scmp.le.s32.totalorder %s64, 16
    %p80 = pnand %p62, %p79
    %p81 = pneg %p80
    // Predicated region
    $region22: #{tpu_custom_call.1} parent=1 // pred_check
      _
    $region23: #{tpu_custom_call.1} parent=1 // pred_check_branch
      %83 = sbr.rel (%p80) target = $region25
    $region24: #{tpu_custom_call.1} parent=1 // pred_region
      %v84 = vld [vmem:[#allocation2] sm:$0xff]
      %v85 = vadd.f32 %v78, 0.0
      %v86 = vadd.f32 %v84, %v85
      %87 = vst [vmem:[#allocation2] sm:$0xff] %v86
    $region25: #{tpu_custom_call.1} parent=1 // pred_fallthru
      _
    %p88 = pnand %p62, %p65
    %p89 = pneg %p88
    // Predicated region
    $region26: #{tpu_custom_call.1} parent=1 // pred_check
      _
    $region27: #{tpu_custom_call.1} parent=1 // pred_check_branch
      %91 = sbr.rel (%p88) target = $region29
    $region28: #{tpu_custom_call.1} parent=1 // pred_region
      %v92 = vlaneseq
      %v93 = vshrl.u32 %v92, 7
      %v94 = vmul.u32 %v93, 128
      %v95 = vstv %s63
      %v96 = vadd.s32 %v95, %v94
      %v97 = vlaneseq
      %v98 = vand.u32 %v97, 127
      %v99 = vadd.s32 %v96, %v98
      %vm100 = vcmp.lt.s32.totalorder %v99, 16
      %v101 = vsel %vm100, %v78, 0.0
      %v102 = vld [vmem:[#allocation2] sm:$0xff]
      %v103 = vadd.f32 %v101, 0.0
      %v104 = vadd.f32 %v102, %v103
      %105 = vst [vmem:[#allocation2] sm:$0xff] %v104
    $region29: #{tpu_custom_call.1} parent=1 // pred_fallthru
      _
    // Predicated region
    $region30: #{tpu_custom_call.1} parent=1 // pred_check
      %p106 = pneg %p56
    $region31: #{tpu_custom_call.1} parent=1 // pred_check_branch
      %108 = sbr.rel (%p106) target = $region33
    $region32: #{tpu_custom_call.1} parent=1 // pred_region
      %v109 = vld [vmem:[#allocation2] sm:$0xff]
      %110 = vst [vmem:[#allocation8] sm:$0xff] %v109
    $region33: #{tpu_custom_call.1} parent=1 // pred_fallthru
      _
    // Predicated region
    $region34: #{tpu_custom_call.1} parent=1 // pred_check
      _
    $region35: #{tpu_custom_call.1} parent=1 // pred_check_branch
      %112 = sbr.rel (0) target = $region37
    $region36: #{tpu_custom_call.1} parent=1 // pred_region
      %114 = vsyncadd [#allocation5], 0
      %s116 = sshll.u32 [#allocation8], 4
      %s117 = int_to_ptr.vmem [resolvable:$true] %s116
      %s118 = sshll.u32 %s2, 4
      %s119 = int_to_ptr.hbm [resolvable:$true] %s118
      %121 = dma.vmem_to_hbm [thread:$0]  %s117, 128, %s119, [#allocation5]
    $region37: #{tpu_custom_call.1} parent=1 // pred_fallthru
      _
    // Predicated region
    $region38: #{tpu_custom_call.1} parent=1 // pred_check
      _
    $region39: #{tpu_custom_call.1} parent=1 // pred_check_branch
      %123 = sbr.rel (0) target = $region41
    $region40: #{tpu_custom_call.1} parent=1 // pred_region
      %125 = dma.done [#allocation5], 128
    $region41: #{tpu_custom_call.1} parent=1 // pred_fallthru
      _
    %126 = vsyncpa [#allocation4], 1
    %127 = vsyncpa [#allocation7], 1
    %128 = vsyncpa [#allocation5], 1

</llo_original>
